<compile_context>
chip_gen: v6e
topology: v6e:2x2x1
jax: 0.10.0
libtpu: 0.0.40
codegen_flags: <defaults>
</compile_context>

<pallas_src>
import functools

import jax
import jax.numpy as jnp
from jax.experimental import pallas as pl
from jax.experimental.pallas import tpu as pltpu


# ----------------------------- Pallas kernel -------------------------------

def _mlp_fused_kernel(*refs, num_layers: int):
    """Fused MLP forward.

    refs = (x_ref, w1_ref, b1_ref, ..., wN_ref, bN_ref, o_ref)
      x_ref : (TB, Din)           activations (batch tile)
      wi_ref: (Din_i, Dout_i)     pre-transposed weight
      bi_ref: (1, Dout_i)         bias (broadcast over batch)
      o_ref : (TB, action_dim)    final Q-values

    Hidden layers: y = relu(x @ W + b); final layer: identity.
    Intermediates live entirely in vregs/VMEM — no HBM roundtrips.
    """
    x_ref = refs[0]
    o_ref = refs[-1]
    h = x_ref[...]
    for l in range(num_layers):
        w = refs[1 + 2 * l][...]
        b = refs[2 + 2 * l][...]
        h = jnp.dot(h, w, preferred_element_type=jnp.float32) + b
        if l < num_layers - 1:
            h = jnp.maximum(h, 0.0)  # ReLU on hidden layers only
    o_ref[...] = h.astype(o_ref.dtype)


# ------------------------------- Wrapper ------------------------------------

def _choose_batch_tile(batch: int) -> int:
    """Whole batch when small; otherwise a 8-aligned tile that divides B."""
    if batch <= 256:
        return batch
    for tb in (256, 128, 64, 32, 16, 8):
        if batch % tb == 0:
            return tb
    return batch


def qnetwork_forward(params, state):
    """Single fused pallas_call for the whole QNetwork_DQN forward pass.

    params: list of (w, b) with w: (Din, Dout) (pre-transposed at init),
            b: (1, Dout).
    state : (B, state_dim) float32.
    """
    B, state_dim = state.shape
    num_layers = len(params)
    out_dim = params[-1][0].shape[1]

    tile_b = _choose_batch_tile(B)
    grid = (B // tile_b,)

    in_specs = [pl.BlockSpec((tile_b, state_dim), lambda i: (i, 0))]
    flat_args = [state]
    flops = 0
    bytes_accessed = int(state.size) * 4
    for (w, b) in params:
        din, dout = w.shape
        in_specs.append(pl.BlockSpec((din, dout), lambda i: (0, 0)))
        in_specs.append(pl.BlockSpec((1, dout), lambda i: (0, 0)))
        flat_args += [w, b]
        flops += 2 * B * din * dout
        bytes_accessed += (int(w.size) + int(b.size)) * 4
    bytes_accessed += B * out_dim * 4

    out_spec = pl.BlockSpec((tile_b, out_dim), lambda i: (i, 0))

    return pl.pallas_call(
        functools.partial(_mlp_fused_kernel, num_layers=num_layers),
        out_shape=jax.ShapeDtypeStruct((B, out_dim), state.dtype),
        grid=grid,
        in_specs=in_specs,
        out_specs=out_spec,
        compiler_params=pltpu.CompilerParams(
            dimension_semantics=("parallel",)),
        cost_estimate=pl.CostEstimate(
            flops=flops, transcendentals=0, bytes_accessed=bytes_accessed),
    )(*flat_args)


# ------------------------- Parameter initialization ------------------------

def _orthogonal(key, out_dim, in_dim, gain):
    """Orthogonal init (same semantics as torch.nn.init.orthogonal_)."""
    rows, cols = out_dim, in_dim
    flat = jax.random.normal(key, (max(rows, cols), min(rows, cols)), jnp.float32)
    q, r = jnp.linalg.qr(flat)
    d = jnp.diag(r)
    q = q * jnp.where(d == 0, 1.0, jnp.sign(d))  # unique decomposition, no zeroed cols
    if rows < cols:
        q = q.T
    return gain * q[:rows, :cols]


def init_qnetwork_params(key, state_dim, action_dim, hidden_dims):
    """Matches QNetwork_DQN.__init__: orthogonal(gain=tanh) weights, zero bias.

    Weights are stored pre-transposed as (Din, Dout) and biases as (1, Dout)
    so the forward pass never pays a per-call transpose/reshape in HBM.
    """
    gain = 5.0 / 3.0  # torch.nn.init.calculate_gain('tanh')
    layer_dims = list(hidden_dims) + [action_dim]
    params = []
    in_dim = state_dim
    for out_dim in layer_dims:
        key, sub = jax.random.split(key)
        w_torch = _orthogonal(sub, out_dim, in_dim, gain)   # torch layout (out, in)
        w = jnp.asarray(w_torch.T)                          # stored as (Din, Dout)
        b = jnp.zeros((1, out_dim), jnp.float32)            # (1, Dout)
        params.append((w, b))
        in_dim = out_dim
    return params


# ------------------------------ Reference -----------------------------------

def qnetwork_forward_ref(params, state):
    """Pure-JAX reference (hidden: Linear+ReLU, final: Linear+Identity)."""
    x = state
    n = len(params)
    for idx, (w, b) in enumerate(params):
        x = x @ w + b
        if idx < n - 1:
            x = jnp.maximum(x, 0.0)
    return x


# ----------------------------------- Main -----------------------------------

if __name__ == "__main__":
    key = jax.random.PRNGKey(0)
    key, pkey, xkey = jax.random.split(key, 3)

    batch = 2
    state_dim = 16
    action_dim = 4
    hidden_dims = [32, 32]

    params = init_qnetwork_params(pkey, state_dim, action_dim, hidden_dims)
    state = jax.random.normal(xkey, (batch, state_dim), jnp.float32)

    q_values = qnetwork_forward(params, state)
    q_values = jax.block_until_ready(q_values)

    q_ref = qnetwork_forward_ref(params, state)
    assert q_values.shape == (batch, action_dim)
    assert jnp.allclose(q_values, q_ref, atol=1e-5, rtol=1e-5)

    print("KERNEL_OK")
</pallas_src>

<mosaic_0001>
module attributes {stable_mosaic.version = 11 : i64} {
  func.func @_mlp_fused_kernel(%arg0: i32, %arg1: memref<2x16xf32, #tpu.memory_space<vmem>>, %arg2: memref<16x32xf32, #tpu.memory_space<vmem>>, %arg3: memref<1x32xf32, #tpu.memory_space<vmem>>, %arg4: memref<32x32xf32, #tpu.memory_space<vmem>>, %arg5: memref<1x32xf32, #tpu.memory_space<vmem>>, %arg6: memref<32x4xf32, #tpu.memory_space<vmem>>, %arg7: memref<1x4xf32, #tpu.memory_space<vmem>>, %arg8: memref<2x4xf32, #tpu.memory_space<vmem>>) attributes {dimension_semantics = [#tpu.dimension_semantics<parallel>], iteration_bounds = array<i64: 1>, scalar_prefetch = 0 : i64, scratch_operands = 0 : i64, tpu.core_type = #tpu.core_type<tc>, window_params = [{transform_indices = @transform_0, window_bounds = array<i64: 2, 16>}, {pipeline_mode = #tpu.pipeline_mode<synchronous>, transform_indices = @transform_1, window_bounds = array<i64: 16, 32>}, {pipeline_mode = #tpu.pipeline_mode<synchronous>, transform_indices = @transform_2, window_bounds = array<i64: 1, 32>}, {pipeline_mode = #tpu.pipeline_mode<synchronous>, transform_indices = @transform_3, window_bounds = array<i64: 32, 32>}, {pipeline_mode = #tpu.pipeline_mode<synchronous>, transform_indices = @transform_4, window_bounds = array<i64: 1, 32>}, {pipeline_mode = #tpu.pipeline_mode<synchronous>, transform_indices = @transform_5, window_bounds = array<i64: 32, 4>}, {pipeline_mode = #tpu.pipeline_mode<synchronous>, transform_indices = @transform_6, window_bounds = array<i64: 1, 4>}, {transform_indices = @transform_7, window_bounds = array<i64: 2, 4>}]} {
    %c0 = arith.constant 0 : index
    %c0_0 = arith.constant 0 : index
    %0 = vector.load %arg1[%c0, %c0_0] : memref<2x16xf32, #tpu.memory_space<vmem>>, vector<2x16xf32>
    %c0_1 = arith.constant 0 : index
    %c0_2 = arith.constant 0 : index
    %1 = vector.load %arg2[%c0_1, %c0_2] : memref<16x32xf32, #tpu.memory_space<vmem>>, vector<16x32xf32>
    %c0_3 = arith.constant 0 : index
    %c0_4 = arith.constant 0 : index
    %2 = vector.load %arg3[%c0_3, %c0_4] : memref<1x32xf32, #tpu.memory_space<vmem>>, vector<1x32xf32>
    %cst = arith.constant dense<0.000000e+00> : vector<2x32xf32>
    %3 = tpu.matmul %0, %1, %cst {dimension_numbers = #tpu.dot_dimension_numbers<[1], [0], [0], [1], [0, 0, 1, 1], [], []>} : vector<2x16xf32>, vector<16x32xf32>, vector<2x32xf32> -> vector<2x32xf32>
    %4 = vector.broadcast %2 : vector<1x32xf32> to vector<2x32xf32>
    %5 = arith.addf %3, %4 : vector<2x32xf32>
    %cst_5 = arith.constant 0.000000e+00 : f32
    %6 = vector.broadcast %cst_5 : f32 to vector<2x32xf32>
    %7 = arith.maximumf %5, %6 : vector<2x32xf32>
    %c0_6 = arith.constant 0 : index
    %c0_7 = arith.constant 0 : index
    %8 = vector.load %arg4[%c0_6, %c0_7] : memref<32x32xf32, #tpu.memory_space<vmem>>, vector<32x32xf32>
    %c0_8 = arith.constant 0 : index
    %c0_9 = arith.constant 0 : index
    %9 = vector.load %arg5[%c0_8, %c0_9] : memref<1x32xf32, #tpu.memory_space<vmem>>, vector<1x32xf32>
    %cst_10 = arith.constant dense<0.000000e+00> : vector<2x32xf32>
    %10 = tpu.matmul %7, %8, %cst_10 {dimension_numbers = #tpu.dot_dimension_numbers<[1], [0], [0], [1], [0, 0, 1, 1], [], []>} : vector<2x32xf32>, vector<32x32xf32>, vector<2x32xf32> -> vector<2x32xf32>
    %11 = vector.broadcast %9 : vector<1x32xf32> to vector<2x32xf32>
    %12 = arith.addf %10, %11 : vector<2x32xf32>
    %cst_11 = arith.constant 0.000000e+00 : f32
    %13 = vector.broadcast %cst_11 : f32 to vector<2x32xf32>
    %14 = arith.maximumf %12, %13 : vector<2x32xf32>
    %c0_12 = arith.constant 0 : index
    %c0_13 = arith.constant 0 : index
    %15 = vector.load %arg6[%c0_12, %c0_13] : memref<32x4xf32, #tpu.memory_space<vmem>>, vector<32x4xf32>
    %c0_14 = arith.constant 0 : index
    %c0_15 = arith.constant 0 : index
    %16 = vector.load %arg7[%c0_14, %c0_15] : memref<1x4xf32, #tpu.memory_space<vmem>>, vector<1x4xf32>
    %cst_16 = arith.constant dense<0.000000e+00> : vector<2x4xf32>
    %17 = tpu.matmul %14, %15, %cst_16 {dimension_numbers = #tpu.dot_dimension_numbers<[1], [0], [0], [1], [0, 0, 1, 1], [], []>} : vector<2x32xf32>, vector<32x4xf32>, vector<2x4xf32> -> vector<2x4xf32>
    %18 = vector.broadcast %16 : vector<1x4xf32> to vector<2x4xf32>
    %19 = arith.addf %17, %18 : vector<2x4xf32>
    %c0_17 = arith.constant 0 : index
    %c0_18 = arith.constant 0 : index
    %20 = vector.load %arg8[%c0_17, %c0_18] : memref<2x4xf32, #tpu.memory_space<vmem>>, vector<2x4xf32>
    tpu.vector_store %arg8[%c0_17, %c0_18], %19 {strides = array<i32>} : memref<2x4xf32, #tpu.memory_space<vmem>>, vector<2x4xf32>,
    return
  }
  func.func @transform_0(%arg0: i32) -> (i32, i32) {
    %c0_i32 = arith.constant 0 : i32
    %c0_i32_0 = arith.constant 0 : i32
    return %arg0, %c0_i32 : i32, i32
  }
  func.func @transform_1(%arg0: i32) -> (i32, i32) {
    %c0_i32 = arith.constant 0 : i32
    %c0_i32_0 = arith.constant 0 : i32
    %c0_i32_1 = arith.constant 0 : i32
    return %c0_i32, %c0_i32_0 : i32, i32
  }
  func.func @transform_2(%arg0: i32) -> (i32, i32) {
    %c0_i32 = arith.constant 0 : i32
    %c0_i32_0 = arith.constant 0 : i32
    %c0_i32_1 = arith.constant 0 : i32
    return %c0_i32, %c0_i32_0 : i32, i32
  }
  func.func @transform_3(%arg0: i32) -> (i32, i32) {
    %c0_i32 = arith.constant 0 : i32
    %c0_i32_0 = arith.constant 0 : i32
    %c0_i32_1 = arith.constant 0 : i32
    return %c0_i32, %c0_i32_0 : i32, i32
  }
  func.func @transform_4(%arg0: i32) -> (i32, i32) {
    %c0_i32 = arith.constant 0 : i32
    %c0_i32_0 = arith.constant 0 : i32
    %c0_i32_1 = arith.constant 0 : i32
    return %c0_i32, %c0_i32_0 : i32, i32
  }
  func.func @transform_5(%arg0: i32) -> (i32, i32) {
    %c0_i32 = arith.constant 0 : i32
    %c0_i32_0 = arith.constant 0 : i32
    %c0_i32_1 = arith.constant 0 : i32
    return %c0_i32, %c0_i32_0 : i32, i32
  }
  func.func @transform_6(%arg0: i32) -> (i32, i32) {
    %c0_i32 = arith.constant 0 : i32
    %c0_i32_0 = arith.constant 0 : i32
    %c0_i32_1 = arith.constant 0 : i32
    return %c0_i32, %c0_i32_0 : i32, i32
  }
  func.func @transform_7(%arg0: i32) -> (i32, i32) {
    %c0_i32 = arith.constant 0 : i32
    %c0_i32_0 = arith.constant 0 : i32
    return %arg0, %c0_i32 : i32, i32
  }
}

</mosaic_0001>

<llo_original>
// kernel: tpu_custom_call.1
$region0: #{tpu_custom_call.1}
  #allocation0 [shape = 'u32[]', space=smem, size = 0x4, offset = 0x4, fixed_abs, tag = 'smem constant byte address 0x4 - core index']
  #allocation1 [shape = 'u32[144,128]{1,0:T(1,128)}', space=vmem, size = 0x12000, scoped, tag = 'internal scratch']
  %s0 = inlined_call_operand.vmem [shape: f32[2,16], index: 0, kind: input, shape index: {}]
  %s1 = inlined_call_operand.hbm [shape: f32[16,32], index: 1, kind: input, shape index: {}]
  %s2 = inlined_call_operand.vmem [shape: f32[1,32], index: 2, kind: input, shape index: {}]
  %s3 = inlined_call_operand.vmem [shape: f32[32,32], index: 3, kind: input, shape index: {}]
  %s4 = inlined_call_operand.vmem [shape: f32[1,32], index: 4, kind: input, shape index: {}]
  %s5 = inlined_call_operand.vmem [shape: f32[32,4], index: 5, kind: input, shape index: {}]
  %s6 = inlined_call_operand.vmem [shape: f32[1,4], index: 6, kind: input, shape index: {}]
  %s7 = inlined_call_operand.hbm [shape: f32[2,4], index: 7, kind: output, shape index: {}]
  %s8 = sld [smem:[#allocation0]]
  $region42: #{tpu_custom_call.1} parent=0
    _
  %s10 = ssub.s32 1, %s8
  %s11 = scalar_select 0, %s10, %s8
  $region1: #{tpu_custom_call.1} parent=0
    #allocation2 [shape = 'u8[8192]{0}', space=vmem, size = 0x2000, scoped, tag = 'input window, operand 1, single buffered']
    #allocation3 [shape = 's32[1]{0}', space=sflag, size = 0x4, scoped, tag = 'scoped memory for tpu_custom_call.1']
    #allocation4 [shape = 's32[1]{0}', space=sflag, size = 0x4, scoped, tag = 'scoped memory for tpu_custom_call.1']
    #allocation5 [shape = 'u8[1024]{0}', space=vmem, size = 0x400, scoped, tag = 'output window, operand 0, single buffered']
    %12 = vsyncpa [#allocation3], 0
    %13 = vsyncpa [#allocation4], 0
    // Predicated region
    $region2: #{tpu_custom_call.1} parent=1 // pred_check
      _
    $region3: #{tpu_custom_call.1} parent=1 // pred_check_branch
      %15 = sbr.rel (0) target = $region5
    $region4: #{tpu_custom_call.1} parent=1 // pred_region
      _
    $region5: #{tpu_custom_call.1} parent=1 // pred_fallthru
      _
    // Predicated region
    $region6: #{tpu_custom_call.1} parent=1 // pred_check
      _
    $region7: #{tpu_custom_call.1} parent=1 // pred_check_branch
      %17 = sbr.rel (0) target = $region9
    $region8: #{tpu_custom_call.1} parent=1 // pred_region
      %s19 = ssub.s32 256, 256
      %20 = vsyncadd [#allocation3], %s19
      %s21 = sshll.u32 [#allocation2], 4
      %s22 = int_to_ptr.vmem [resolvable:$true] %s21
      %27 = dma.hbm_to_vmem [thread:$0]  %s1, 256, %s22, [#allocation3], 128, 128, 8
    $region9: #{tpu_custom_call.1} parent=1 // pred_fallthru
      _
    // Predicated region
    $region10: #{tpu_custom_call.1} parent=1 // pred_check
      _
    $region11: #{tpu_custom_call.1} parent=1 // pred_check_branch
      %29 = sbr.rel (0) target = $region13
    $region12: #{tpu_custom_call.1} parent=1 // pred_region
      _
    $region13: #{tpu_custom_call.1} parent=1 // pred_fallthru
      _
    // Predicated region
    $region14: #{tpu_custom_call.1} parent=1 // pred_check
      _
    $region15: #{tpu_custom_call.1} parent=1 // pred_check_branch
      %31 = sbr.rel (0) target = $region17
    $region16: #{tpu_custom_call.1} parent=1 // pred_region
      _
    $region17: #{tpu_custom_call.1} parent=1 // pred_fallthru
      _
    // Predicated region
    $region18: #{tpu_custom_call.1} parent=1 // pred_check
      _
    $region19: #{tpu_custom_call.1} parent=1 // pred_check_branch
      %33 = sbr.rel (0) target = $region21
    $region20: #{tpu_custom_call.1} parent=1 // pred_region
      _
    $region21: #{tpu_custom_call.1} parent=1 // pred_fallthru
      _
    // Predicated region
    $region22: #{tpu_custom_call.1} parent=1 // pred_check
      _
    $region23: #{tpu_custom_call.1} parent=1 // pred_check_branch
      %35 = sbr.rel (0) target = $region25
    $region24: #{tpu_custom_call.1} parent=1 // pred_region
      _
    $region25: #{tpu_custom_call.1} parent=1 // pred_fallthru
      _
    // Predicated region
    $region26: #{tpu_custom_call.1} parent=1 // pred_check
      _
    $region27: #{tpu_custom_call.1} parent=1 // pred_check_branch
      %37 = sbr.rel (0) target = $region29
    $region28: #{tpu_custom_call.1} parent=1 // pred_region
      _
    $region29: #{tpu_custom_call.1} parent=1 // pred_fallthru
      _
    // Predicated region
    $region30: #{tpu_custom_call.1} parent=1 // pred_check
      _
    $region31: #{tpu_custom_call.1} parent=1 // pred_check_branch
      %39 = sbr.rel (0) target = $region33
    $region32: #{tpu_custom_call.1} parent=1 // pred_region
      %40 = dma.done [#allocation3], 256
    $region33: #{tpu_custom_call.1} parent=1 // pred_fallthru
      _
    %v41 = vld [vmem:[%s0] sm:$0x3]
    %v42 = vld [vmem:[#allocation2] sm:$0xff]
    %v43 = vld [vmem:[#allocation2 + $0x8] sm:$0xff]
    %v44 = vld [vmem:[%s2] sm:$0x1]
    %v46 = vlaneseq
    %v47 = vshrl.u32 %v46, 7
    %v48 = vsub.s32 0, %v47
    %v49 = vrot.slane %v44, %v48
    %vm51 = vcmask 130048
    %v53 = vsel %vm51, %v41, 0
    %55 = vmatprep.subr.mxu0 0.0
    %56 = vmatpush1.msra.mxu0 0.0
    %57 = vmatprep.subr.mxu0 0.0
    %58 = vmatpush1.msra.mxu0 0.0
    %59 = vmatprep.subr.mxu0 0.0
    %60 = vmatpush1.msra.mxu0 0.0
    %61 = vmatprep.subr.mxu0 0.0
    %62 = vmatpush1.msra.mxu0 0.0
    %63 = vmatprep.subr.mxu0 0.0
    %64 = vmatpush1.msra.mxu0 0.0
    %65 = vmatprep.subr.mxu0 0.0
    %66 = vmatpush1.msra.mxu0 0.0
    %67 = vmatprep.subr.mxu0 0.0
    %68 = vmatpush1.msra.mxu0 0.0
    %69 = vmatprep.subr.mxu0 0.0
    %70 = vmatpush1.msra.mxu0 0.0
    %71 = vmatprep.subr.mxu0 0.0
    %72 = vmatpush1.msra.mxu0 0.0
    %73 = vmatprep.subr.mxu0 0.0
    %74 = vmatpush1.msra.mxu0 0.0
    %75 = vmatprep.subr.mxu0 0.0
    %76 = vmatpush1.msra.mxu0 0.0
    %77 = vmatprep.subr.mxu0 0.0
    %78 = vmatpush1.msra.mxu0 0.0
    %79 = vmatprep.subr.mxu0 0.0
    %80 = vmatpush1.msra.mxu0 0.0
    %81 = vmatprep.subr.mxu0 0.0
    %82 = vmatpush1.msra.mxu0 0.0
    %83 = vmatprep.subr.mxu0 0.0
    %84 = vmatpush1.msra.mxu0 %v43
    %85 = vmatprep.subr.mxu0 0.0
    %86 = vmatpush1.msra.mxu0 %v42
    %87 = vmatprep.subr.mxu0 0.0
    %88 = vmatpush2.msra.mxu0 0.0
    %89 = vmatprep.subr.mxu0 0.0
    %90 = vmatpush2.msra.mxu0 0.0
    %91 = vmatprep.subr.mxu0 0.0
    %92 = vmatpush2.msra.mxu0 0.0
    %93 = vmatprep.subr.mxu0 0.0
    %94 = vmatpush2.msra.mxu0 0.0
    %95 = vmatprep.subr.mxu0 0.0
    %96 = vmatpush2.msra.mxu0 0.0
    %97 = vmatprep.subr.mxu0 0.0
    %98 = vmatpush2.msra.mxu0 0.0
    %99 = vmatprep.subr.mxu0 0.0
    %100 = vmatpush2.msra.mxu0 0.0
    %101 = vmatprep.subr.mxu0 0.0
    %102 = vmatpush2.msra.mxu0 0.0
    %103 = vmatprep.subr.mxu0 0.0
    %104 = vmatpush2.msra.mxu0 0.0
    %105 = vmatprep.subr.mxu0 0.0
    %106 = vmatpush2.msra.mxu0 0.0
    %107 = vmatprep.subr.mxu0 0.0
    %108 = vmatpush2.msra.mxu0 0.0
    %109 = vmatprep.subr.mxu0 0.0
    %110 = vmatpush2.msra.mxu0 0.0
    %111 = vmatprep.subr.mxu0 0.0
    %112 = vmatpush2.msra.mxu0 0.0
    %113 = vmatprep.subr.mxu0 0.0
    %114 = vmatpush2.msra.mxu0 0.0
    %115 = vmatprep.subr.mxu0 0.0
    %116 = vmatpush2.msra.mxu0 0.0
    %117 = vmatprep.subr.mxu0 0.0
    %118 = vmatpush2.msra.mxu0 0.0
    %119 = vmatprep.mubr.f32.mxu0 0.0
    %120 = vmatmul.mubr.f32.gmra.mxu0 %v53
    %v121 = vpop.f32.mrf.mxu0
    %v122 = vadd.f32 %v49, %v121
    %v123 = vpop.f32.mrf.mxu0
    %124 = vdwg.mxu0
    %v125 = vmax.f32 %v122, 0.0
    %v126 = vld [vmem:[%s3] sm:$0xff]
    %v127 = vld [vmem:[%s3 + $0x8] sm:$0xff]
    %v128 = vld [vmem:[%s3 + $0x10] sm:$0xff]
    %v129 = vld [vmem:[%s3 + $0x18] sm:$0xff]
    %v130 = vld [vmem:[%s4] sm:$0x1]
    %v132 = vlaneseq
    %v133 = vshrl.u32 %v132, 7
    %v134 = vsub.s32 0, %v133
    %v135 = vrot.slane %v130, %v134
    %vm137 = vcmask 261120
    %v139 = vsel %vm137, %v125, 0
    %141 = vmatprep.subr.mxu0 0.0
    %142 = vmatpush1.msra.mxu0 0.0
    %143 = vmatprep.subr.mxu0 0.0
    %144 = vmatpush1.msra.mxu0 0.0
    %145 = vmatprep.subr.mxu0 0.0
    %146 = vmatpush1.msra.mxu0 0.0
    %147 = vmatprep.subr.mxu0 0.0
    %148 = vmatpush1.msra.mxu0 0.0
    %149 = vmatprep.subr.mxu0 0.0
    %150 = vmatpush1.msra.mxu0 0.0
    %151 = vmatprep.subr.mxu0 0.0
    %152 = vmatpush1.msra.mxu0 0.0
    %153 = vmatprep.subr.mxu0 0.0
    %154 = vmatpush1.msra.mxu0 0.0
    %155 = vmatprep.subr.mxu0 0.0
    %156 = vmatpush1.msra.mxu0 0.0
    %157 = vmatprep.subr.mxu0 0.0
    %158 = vmatpush1.msra.mxu0 0.0
    %159 = vmatprep.subr.mxu0 0.0
    %160 = vmatpush1.msra.mxu0 0.0
    %161 = vmatprep.subr.mxu0 0.0
    %162 = vmatpush1.msra.mxu0 0.0
    %163 = vmatprep.subr.mxu0 0.0
    %164 = vmatpush1.msra.mxu0 0.0
    %165 = vmatprep.subr.mxu0 0.0
    %166 = vmatpush1.msra.mxu0 %v129
    %167 = vmatprep.subr.mxu0 0.0
    %168 = vmatpush1.msra.mxu0 %v128
    %169 = vmatprep.subr.mxu0 0.0
    %170 = vmatpush1.msra.mxu0 %v127
    %171 = vmatprep.subr.mxu0 0.0
    %172 = vmatpush1.msra.mxu0 %v126
    %173 = vmatprep.subr.mxu0 0.0
    %174 = vmatpush2.msra.mxu0 0.0
    %175 = vmatprep.subr.mxu0 0.0
    %176 = vmatpush2.msra.mxu0 0.0
    %177 = vmatprep.subr.mxu0 0.0
    %178 = vmatpush2.msra.mxu0 0.0
    %179 = vmatprep.subr.mxu0 0.0
    %180 = vmatpush2.msra.mxu0 0.0
    %181 = vmatprep.subr.mxu0 0.0
    %182 = vmatpush2.msra.mxu0 0.0
    %183 = vmatprep.subr.mxu0 0.0
    %184 = vmatpush2.msra.mxu0 0.0
    %185 = vmatprep.subr.mxu0 0.0
    %186 = vmatpush2.msra.mxu0 0.0
    %187 = vmatprep.subr.mxu0 0.0
    %188 = vmatpush2.msra.mxu0 0.0
    %189 = vmatprep.subr.mxu0 0.0
    %190 = vmatpush2.msra.mxu0 0.0
    %191 = vmatprep.subr.mxu0 0.0
    %192 = vmatpush2.msra.mxu0 0.0
    %193 = vmatprep.subr.mxu0 0.0
    %194 = vmatpush2.msra.mxu0 0.0
    %195 = vmatprep.subr.mxu0 0.0
    %196 = vmatpush2.msra.mxu0 0.0
    %197 = vmatprep.subr.mxu0 0.0
    %198 = vmatpush2.msra.mxu0 0.0
    %199 = vmatprep.subr.mxu0 0.0
    %200 = vmatpush2.msra.mxu0 0.0
    %201 = vmatprep.subr.mxu0 0.0
    %202 = vmatpush2.msra.mxu0 0.0
    %203 = vmatprep.subr.mxu0 0.0
    %204 = vmatpush2.msra.mxu0 0.0
    %205 = vmatprep.mubr.f32.mxu0 0.0
    %206 = vmatmul.mubr.f32.gmra.mxu0 %v139
    %v207 = vpop.f32.mrf.mxu0
    %v208 = vadd.f32 %v135, %v207
    %v209 = vpop.f32.mrf.mxu0
    %210 = vdwg.mxu0
    %v211 = vmax.f32 %v208, 0.0
    %v212 = vld [vmem:[%s5] sm:$0xff]
    %v213 = vld [vmem:[%s5 + $0x8] sm:$0xff]
    %v214 = vld [vmem:[%s5 + $0x10] sm:$0xff]
    %v215 = vld [vmem:[%s5 + $0x18] sm:$0xff]
    %v216 = vld [vmem:[%s6] sm:$0x1]
    %v218 = vlaneseq
    %v219 = vshrl.u32 %v218, 7
    %v220 = vsub.s32 0, %v219
    %v221 = vrot.slane %v216, %v220
    %v224 = vsel %vm137, %v211, 0
    %226 = vmatprep.subr.mxu0 0.0
    %227 = vmatpush1.msra.mxu0 0.0
    %228 = vmatprep.subr.mxu0 0.0
    %229 = vmatpush1.msra.mxu0 0.0
    %230 = vmatprep.subr.mxu0 0.0
    %231 = vmatpush1.msra.mxu0 0.0
    %232 = vmatprep.subr.mxu0 0.0
    %233 = vmatpush1.msra.mxu0 0.0
    %234 = vmatprep.subr.mxu0 0.0
    %235 = vmatpush1.msra.mxu0 0.0
    %236 = vmatprep.subr.mxu0 0.0
    %237 = vmatpush1.msra.mxu0 0.0
    %238 = vmatprep.subr.mxu0 0.0
    %239 = vmatpush1.msra.mxu0 0.0
    %240 = vmatprep.subr.mxu0 0.0
    %241 = vmatpush1.msra.mxu0 0.0
    %242 = vmatprep.subr.mxu0 0.0
    %243 = vmatpush1.msra.mxu0 0.0
    %244 = vmatprep.subr.mxu0 0.0
    %245 = vmatpush1.msra.mxu0 0.0
    %246 = vmatprep.subr.mxu0 0.0
    %247 = vmatpush1.msra.mxu0 0.0
    %248 = vmatprep.subr.mxu0 0.0
    %249 = vmatpush1.msra.mxu0 0.0
    %250 = vmatprep.subr.mxu0 0.0
    %251 = vmatpush1.msra.mxu0 %v215
    %252 = vmatprep.subr.mxu0 0.0
    %253 = vmatpush1.msra.mxu0 %v214
    %254 = vmatprep.subr.mxu0 0.0
    %255 = vmatpush1.msra.mxu0 %v213
    %256 = vmatprep.subr.mxu0 0.0
    %257 = vmatpush1.msra.mxu0 %v212
    %258 = vmatprep.subr.mxu0 0.0
    %259 = vmatpush2.msra.mxu0 0.0
    %260 = vmatprep.subr.mxu0 0.0
    %261 = vmatpush2.msra.mxu0 0.0
    %262 = vmatprep.subr.mxu0 0.0
    %263 = vmatpush2.msra.mxu0 0.0
    %264 = vmatprep.subr.mxu0 0.0
    %265 = vmatpush2.msra.mxu0 0.0
    %266 = vmatprep.subr.mxu0 0.0
    %267 = vmatpush2.msra.mxu0 0.0
    %268 = vmatprep.subr.mxu0 0.0
    %269 = vmatpush2.msra.mxu0 0.0
    %270 = vmatprep.subr.mxu0 0.0
    %271 = vmatpush2.msra.mxu0 0.0
    %272 = vmatprep.subr.mxu0 0.0
    %273 = vmatpush2.msra.mxu0 0.0
    %274 = vmatprep.subr.mxu0 0.0
    %275 = vmatpush2.msra.mxu0 0.0
    %276 = vmatprep.subr.mxu0 0.0
    %277 = vmatpush2.msra.mxu0 0.0
    %278 = vmatprep.subr.mxu0 0.0
    %279 = vmatpush2.msra.mxu0 0.0
    %280 = vmatprep.subr.mxu0 0.0
    %281 = vmatpush2.msra.mxu0 0.0
    %282 = vmatprep.subr.mxu0 0.0
    %283 = vmatpush2.msra.mxu0 0.0
    %284 = vmatprep.subr.mxu0 0.0
    %285 = vmatpush2.msra.mxu0 0.0
    %286 = vmatprep.subr.mxu0 0.0
    %287 = vmatpush2.msra.mxu0 0.0
    %288 = vmatprep.subr.mxu0 0.0
    %289 = vmatpush2.msra.mxu0 0.0
    %290 = vmatprep.mubr.f32.mxu0 0.0
    %291 = vmatmul.mubr.f32.gmra.mxu0 %v224
    %v292 = vpop.f32.mrf.mxu0
    %v293 = vadd.f32 %v221, %v292
    %v294 = vpop.f32.mrf.mxu0
    %295 = vdwg.mxu0
    %vm296 = vcmask 25600
    %297 = vst.msk [vmem:[#allocation5] sm:$0x3] %vm296, %v293
    // Predicated region
    $region34: #{tpu_custom_call.1} parent=1 // pred_check
      _
    $region35: #{tpu_custom_call.1} parent=1 // pred_check_branch
      %299 = sbr.rel (0) target = $region37
    $region36: #{tpu_custom_call.1} parent=1 // pred_region
      %s301 = ssub.s32 32, 32
      %302 = vsyncadd [#allocation4], %s301
      %s304 = sshll.u32 [#allocation5], 4
      %s305 = int_to_ptr.vmem [resolvable:$true] %s304
      %307 = dma.vmem_to_hbm [thread:$0]  %s305, 32, %s7, [#allocation4]
    $region37: #{tpu_custom_call.1} parent=1 // pred_fallthru
      _
    // Predicated region
    $region38: #{tpu_custom_call.1} parent=1 // pred_check
      _
    $region39: #{tpu_custom_call.1} parent=1 // pred_check_branch
      %309 = sbr.rel (0) target = $region41
    $region40: #{tpu_custom_call.1} parent=1 // pred_region
      %310 = dma.done [#allocation4], 32
    $region41: #{tpu_custom_call.1} parent=1 // pred_fallthru
      _
    %311 = vsyncpa [#allocation3], 1
    %312 = vsyncpa [#allocation4], 1

</llo_original>
